<compile_context>
chip_gen: v7x
topology: tpu7x:2x2x1
jax: 0.10.0
libtpu: 0.0.40
codegen_flags: <defaults>
</compile_context>

<pallas_src>
import jax
import jax.numpy as jnp
from jax.experimental import pallas as pl
from jax.experimental.pallas import tpu as pltpu


def _critic_kernel(state_ref, action_ref, w1s_ref, w1a_ref, b1_ref,
                   w2_ref, b2_ref, w3_ref, b3_ref, q_ref):
    # Feature-major: batch lives on the lane axis; intermediates are (H, TB).
    s = state_ref[...]           # (TB, S) batch-major block
    a = action_ref[...]          # (TB, A)
    # fc1 on split weights: h1 = W1s @ s^T + W1a @ a^T + b1  ==  fc1(cat(s, a))^T
    h1 = (jnp.einsum("hk,bk->hb", w1s_ref[...], s,
                     preferred_element_type=jnp.float32)
          + jnp.einsum("hk,bk->hb", w1a_ref[...], a,
                       preferred_element_type=jnp.float32)
          + b1_ref[...])                                   # (H, TB)
    h1 = jnp.maximum(h1, 0.0)
    # fc2: (H, H) @ (H, TB)
    h2 = jnp.dot(w2_ref[...], h1, preferred_element_type=jnp.float32) + b2_ref[...]
    h2 = jnp.maximum(h2, 0.0)
    # q_out: (1, H) @ (H, TB) -> (1, TB), lane-dense store.
    q = jnp.dot(w3_ref[...], h2, preferred_element_type=jnp.float32) + b3_ref[0, 0]
    q_ref[...] = q.astype(q_ref.dtype)


def _round_up(x, m):
    return ((x + m - 1) // m) * m


def prepare_critic_params(params, state_size):
    """One-time re-layout of PyTorch-layout params for the kernel.

    Hoisted out of the forward hot path so the pallas_call is the only op there.
    Input: (w1, b1, w2, b2, w3, b3) with weights (out, in) and biases (out,).
    """
    w1, b1, w2, b2, w3, b3 = params
    w1 = jnp.asarray(w1, jnp.float32)
    w1s = w1[:, :state_size]                                  # (H, S)
    w1a = w1[:, state_size:]                                  # (H, A)
    return (w1s, w1a,
            jnp.asarray(b1, jnp.float32).reshape(-1, 1),      # (H, 1)
            jnp.asarray(w2, jnp.float32),                     # (H, H)
            jnp.asarray(b2, jnp.float32).reshape(-1, 1),      # (H, 1)
            jnp.asarray(w3, jnp.float32).reshape(1, -1),      # (1, H)
            jnp.asarray(b3, jnp.float32).reshape(1, 1))       # (1, 1) -> SMEM


def critic_forward(state, action, kernel_params, *, tb=2048):
    """q = q_out(relu(fc2(relu(fc1(cat(state, action)))))) as one Pallas kernel."""
    if action.ndim == 1:
        action = action[:, None]
    if state.ndim == 1:
        state = state[None, :]
    if state.dtype != jnp.float32:
        state = state.astype(jnp.float32)
    if action.dtype != jnp.float32:
        action = action.astype(jnp.float32)

    w1s, w1a, b1, w2, b2, w3, b3 = kernel_params
    B, S = state.shape
    A = action.shape[-1]

    # ---- batch tile selection --------------------------------------------------
    # Tiled path uses TB % 128 == 0 so the (1, TB) output block is lane-aligned.
    # Small batches use a single full-array block (block == array dims, no
    # alignment constraints, one grid step).
    if B < 256:
        TB = B
    else:
        TB = max(128, (min(int(tb), 16384) // 128) * 128)
        # Guarantee >= 2 grid steps so both v7x TensorCores get work (free on
        # v5e/v6e, where the grid is just a sequential loop).
        TB = min(TB, _round_up(-(-B // 2), 128))
    num_tiles = -(-B // TB)
    b_ceil = num_tiles * TB        # output padded to whole tiles; tail sliced off

    # Lane-padded (TB,S)/(TB,A) input blocks dominate VMEM: ~TB*512 B per buffer,
    # double-buffered, two inputs.  Raise the scoped-VMEM cap when sweeping TB up;
    # keep well under v7x's 64 MiB physical VMEM.
    vmem_est = 4 * TB * 512 + (4 << 20)
    vmem_limit = int(min(max(vmem_est, 32 << 20), 48 << 20))

    full = lambda arr: pl.BlockSpec(arr.shape, lambda i: (0, 0))

    out = pl.pallas_call(
        _critic_kernel,
        out_shape=jax.ShapeDtypeStruct((1, b_ceil), jnp.float32),
        grid=(num_tiles,),
        in_specs=[
            pl.BlockSpec((TB, S), lambda i: (i, 0)),            # state rows
            pl.BlockSpec((TB, A), lambda i: (i, 0)),            # action rows
            full(w1s), full(w1a), full(b1),                     # VMEM-resident
            full(w2), full(b2), full(w3),
            pl.BlockSpec(memory_space=pltpu.MemorySpace.SMEM),  # b3 scalar
        ],
        out_specs=pl.BlockSpec((1, TB), lambda i: (0, i)),      # lane-dense q
        compiler_params=pltpu.CompilerParams(
            dimension_semantics=("parallel",),
            vmem_limit_bytes=vmem_limit),
    )(state, action, w1s, w1a, b1, w2, b2, w3, b3)

    return out[0, :B][:, None]


def init_critic_params(key, state_size, action_size, hidden_size=32):
    """PyTorch nn.Linear-style params: weight (out, in), bias (out,), U(+-1/sqrt(fan_in))."""
    def linear(k, fan_in, fan_out):
        kw, kb = jax.random.split(k)
        lim = 1.0 / jnp.sqrt(jnp.float32(fan_in))
        w = jax.random.uniform(kw, (fan_out, fan_in), jnp.float32, -lim, lim)
        b = jax.random.uniform(kb, (fan_out,), jnp.float32, -lim, lim)
        return w, b

    k1, k2, k3 = jax.random.split(key, 3)
    in_dim = state_size + action_size
    w1, b1 = linear(k1, in_dim, hidden_size)
    w2, b2 = linear(k2, hidden_size, hidden_size)
    w3, b3 = linear(k3, hidden_size, 1)
    return (w1, b1, w2, b2, w3, b3)


def _reference(state, action, params):
    w1, b1, w2, b2, w3, b3 = params
    x = jnp.concatenate((state, action), axis=-1)
    h1 = jnp.maximum(x @ w1.T + b1, 0.0)
    h2 = jnp.maximum(h1 @ w2.T + b2, 0.0)
    return h2 @ w3.T + b3


if __name__ == "__main__":
    key = jax.random.PRNGKey(0)
    kp, ks1, ka1, ks2, ka2, ks3, ka3 = jax.random.split(key, 7)

    state_size, action_size, hidden = 8, 2, 32
    torch_params = init_critic_params(kp, state_size, action_size, hidden)
    kparams = prepare_critic_params(torch_params, state_size)

    # 1) tiny batch (single full-array block path)
    s1 = jax.random.normal(ks1, (2, state_size), jnp.float32)
    a1 = jax.random.normal(ka1, (2, action_size), jnp.float32)
    q1 = critic_forward(s1, a1, kparams)
    jax.block_until_ready(q1)
    assert q1.shape == (2, 1)
    assert jnp.allclose(q1, _reference(s1, a1, torch_params), atol=1e-4, rtol=1e-5)

    # 2) batch not a multiple of 8 (single unaligned full block)
    s2 = jax.random.normal(ks2, (97, state_size), jnp.float32)
    a2 = jax.random.normal(ka2, (97, action_size), jnp.float32)
    q2 = critic_forward(s2, a2, kparams)
    jax.block_until_ready(q2)
    assert q2.shape == (97, 1)
    assert jnp.allclose(q2, _reference(s2, a2, torch_params), atol=1e-4, rtol=1e-5)

    # 3) tiled path: multi-step grid, ragged last input block, padded lane-dense output
    s3 = jax.random.normal(ks3, (300, state_size), jnp.float32)
    a3 = jax.random.normal(ka3, (300, action_size), jnp.float32)
    q3 = critic_forward(s3, a3, kparams, tb=128)
    jax.block_until_ready(q3)
    assert q3.shape == (300, 1)
    assert jnp.allclose(q3, _reference(s3, a3, torch_params), atol=1e-4, rtol=1e-5)

    print("KERNEL_OK")
</pallas_src>

<mosaic_0001>
module attributes {stable_mosaic.version = 11 : i64} {
  func.func @_critic_kernel(%arg0: i32, %arg1: memref<2x8xf32, #tpu.memory_space<vmem>>, %arg2: memref<2x2xf32, #tpu.memory_space<vmem>>, %arg3: memref<32x8xf32, #tpu.memory_space<vmem>>, %arg4: memref<32x2xf32, #tpu.memory_space<vmem>>, %arg5: memref<32x1xf32, #tpu.memory_space<vmem>>, %arg6: memref<32x32xf32, #tpu.memory_space<vmem>>, %arg7: memref<32x1xf32, #tpu.memory_space<vmem>>, %arg8: memref<1x32xf32, #tpu.memory_space<vmem>>, %arg9: memref<1x1xf32, #tpu.memory_space<smem>>, %arg10: memref<1x2xf32, #tpu.memory_space<vmem>>) attributes {dimension_semantics = [#tpu.dimension_semantics<parallel>], iteration_bounds = array<i64: 1>, scalar_prefetch = 0 : i64, scratch_operands = 0 : i64, tpu.core_type = #tpu.core_type<tc>, window_params = [{transform_indices = @transform_0, window_bounds = array<i64: 2, 8>}, {transform_indices = @transform_1, window_bounds = array<i64: 2, 2>}, {pipeline_mode = #tpu.pipeline_mode<synchronous>, transform_indices = @transform_2, window_bounds = array<i64: 32, 8>}, {pipeline_mode = #tpu.pipeline_mode<synchronous>, transform_indices = @transform_3, window_bounds = array<i64: 32, 2>}, {pipeline_mode = #tpu.pipeline_mode<synchronous>, transform_indices = @transform_4, window_bounds = array<i64: 32, 1>}, {pipeline_mode = #tpu.pipeline_mode<synchronous>, transform_indices = @transform_5, window_bounds = array<i64: 32, 32>}, {pipeline_mode = #tpu.pipeline_mode<synchronous>, transform_indices = @transform_6, window_bounds = array<i64: 32, 1>}, {pipeline_mode = #tpu.pipeline_mode<synchronous>, transform_indices = @transform_7, window_bounds = array<i64: 1, 32>}, {transform_indices = @transform_8, window_bounds = array<i64: 1, 1>}, {transform_indices = @transform_9, window_bounds = array<i64: 1, 2>}]} {
    %c0 = arith.constant 0 : index
    %c0_0 = arith.constant 0 : index
    %0 = vector.load %arg1[%c0, %c0_0] : memref<2x8xf32, #tpu.memory_space<vmem>>, vector<2x8xf32>
    %c0_1 = arith.constant 0 : index
    %c0_2 = arith.constant 0 : index
    %1 = vector.load %arg2[%c0_1, %c0_2] : memref<2x2xf32, #tpu.memory_space<vmem>>, vector<2x2xf32>
    %c0_3 = arith.constant 0 : index
    %c0_4 = arith.constant 0 : index
    %2 = vector.load %arg3[%c0_3, %c0_4] : memref<32x8xf32, #tpu.memory_space<vmem>>, vector<32x8xf32>
    "tpu.trace_start"() <{level = 10 : i32, message = "hk,bk->hb"}> : () -> ()
    %cst = arith.constant dense<0.000000e+00> : vector<32x2xf32>
    %3 = tpu.matmul %2, %0, %cst {dimension_numbers = #tpu.dot_dimension_numbers<[1], [1], [0], [0], [0, 0, 1, 0], [], []>} : vector<32x8xf32>, vector<2x8xf32>, vector<32x2xf32> -> vector<32x2xf32>
    "tpu.trace_stop"() : () -> ()
    %c0_5 = arith.constant 0 : index
    %c0_6 = arith.constant 0 : index
    %4 = vector.load %arg4[%c0_5, %c0_6] : memref<32x2xf32, #tpu.memory_space<vmem>>, vector<32x2xf32>
    "tpu.trace_start"() <{level = 10 : i32, message = "hk,bk->hb"}> : () -> ()
    %cst_7 = arith.constant dense<0.000000e+00> : vector<32x2xf32>
    %5 = tpu.matmul %4, %1, %cst_7 {dimension_numbers = #tpu.dot_dimension_numbers<[1], [1], [0], [0], [0, 0, 1, 0], [], []>} : vector<32x2xf32>, vector<2x2xf32>, vector<32x2xf32> -> vector<32x2xf32>
    "tpu.trace_stop"() : () -> ()
    %6 = arith.addf %3, %5 : vector<32x2xf32>
    %c0_8 = arith.constant 0 : index
    %c0_9 = arith.constant 0 : index
    %7 = vector.load %arg5[%c0_8, %c0_9] : memref<32x1xf32, #tpu.memory_space<vmem>>, vector<32x1xf32>
    %8 = vector.broadcast %7 : vector<32x1xf32> to vector<32x2xf32>
    %9 = arith.addf %6, %8 : vector<32x2xf32>
    %cst_10 = arith.constant 0.000000e+00 : f32
    %10 = vector.broadcast %cst_10 : f32 to vector<32x2xf32>
    %11 = arith.maximumf %9, %10 : vector<32x2xf32>
    %c0_11 = arith.constant 0 : index
    %c0_12 = arith.constant 0 : index
    %12 = vector.load %arg6[%c0_11, %c0_12] : memref<32x32xf32, #tpu.memory_space<vmem>>, vector<32x32xf32>
    %cst_13 = arith.constant dense<0.000000e+00> : vector<32x2xf32>
    %13 = tpu.matmul %12, %11, %cst_13 {dimension_numbers = #tpu.dot_dimension_numbers<[1], [0], [0], [1], [0, 0, 1, 1], [], []>} : vector<32x32xf32>, vector<32x2xf32>, vector<32x2xf32> -> vector<32x2xf32>
    %c0_14 = arith.constant 0 : index
    %c0_15 = arith.constant 0 : index
    %14 = vector.load %arg7[%c0_14, %c0_15] : memref<32x1xf32, #tpu.memory_space<vmem>>, vector<32x1xf32>
    %15 = vector.broadcast %14 : vector<32x1xf32> to vector<32x2xf32>
    %16 = arith.addf %13, %15 : vector<32x2xf32>
    %cst_16 = arith.constant 0.000000e+00 : f32
    %17 = vector.broadcast %cst_16 : f32 to vector<32x2xf32>
    %18 = arith.maximumf %16, %17 : vector<32x2xf32>
    %c0_17 = arith.constant 0 : index
    %c0_18 = arith.constant 0 : index
    %19 = vector.load %arg8[%c0_17, %c0_18] : memref<1x32xf32, #tpu.memory_space<vmem>>, vector<1x32xf32>
    %cst_19 = arith.constant dense<0.000000e+00> : vector<1x2xf32>
    %20 = tpu.matmul %19, %18, %cst_19 {dimension_numbers = #tpu.dot_dimension_numbers<[1], [0], [0], [1], [0, 0, 1, 1], [], []>} : vector<1x32xf32>, vector<32x2xf32>, vector<1x2xf32> -> vector<1x2xf32>
    %c0_20 = arith.constant 0 : index
    %c0_21 = arith.constant 0 : index
    %21 = memref.load %arg9[%c0_20, %c0_21] : memref<1x1xf32, #tpu.memory_space<smem>>
    %22 = vector.broadcast %21 : f32 to vector<1x2xf32>
    %23 = arith.addf %20, %22 : vector<1x2xf32>
    %c0_22 = arith.constant 0 : index
    %c0_23 = arith.constant 0 : index
    %24 = vector.load %arg10[%c0_22, %c0_23] : memref<1x2xf32, #tpu.memory_space<vmem>>, vector<1x2xf32>
    tpu.vector_store %arg10[%c0_22, %c0_23], %23 {strides = array<i32>} : memref<1x2xf32, #tpu.memory_space<vmem>>, vector<1x2xf32>,
    return
  }
  func.func @transform_0(%arg0: i32) -> (i32, i32) {
    %c0_i32 = arith.constant 0 : i32
    %c0_i32_0 = arith.constant 0 : i32
    return %arg0, %c0_i32 : i32, i32
  }
  func.func @transform_1(%arg0: i32) -> (i32, i32) {
    %c0_i32 = arith.constant 0 : i32
    %c0_i32_0 = arith.constant 0 : i32
    return %arg0, %c0_i32 : i32, i32
  }
  func.func @transform_2(%arg0: i32) -> (i32, i32) {
    %c0_i32 = arith.constant 0 : i32
    %c0_i32_0 = arith.constant 0 : i32
    %c0_i32_1 = arith.constant 0 : i32
    return %c0_i32, %c0_i32_0 : i32, i32
  }
  func.func @transform_3(%arg0: i32) -> (i32, i32) {
    %c0_i32 = arith.constant 0 : i32
    %c0_i32_0 = arith.constant 0 : i32
    %c0_i32_1 = arith.constant 0 : i32
    return %c0_i32, %c0_i32_0 : i32, i32
  }
  func.func @transform_4(%arg0: i32) -> (i32, i32) {
    %c0_i32 = arith.constant 0 : i32
    %c0_i32_0 = arith.constant 0 : i32
    %c0_i32_1 = arith.constant 0 : i32
    return %c0_i32, %c0_i32_0 : i32, i32
  }
  func.func @transform_5(%arg0: i32) -> (i32, i32) {
    %c0_i32 = arith.constant 0 : i32
    %c0_i32_0 = arith.constant 0 : i32
    %c0_i32_1 = arith.constant 0 : i32
    return %c0_i32, %c0_i32_0 : i32, i32
  }
  func.func @transform_6(%arg0: i32) -> (i32, i32) {
    %c0_i32 = arith.constant 0 : i32
    %c0_i32_0 = arith.constant 0 : i32
    %c0_i32_1 = arith.constant 0 : i32
    return %c0_i32, %c0_i32_0 : i32, i32
  }
  func.func @transform_7(%arg0: i32) -> (i32, i32) {
    %c0_i32 = arith.constant 0 : i32
    %c0_i32_0 = arith.constant 0 : i32
    %c0_i32_1 = arith.constant 0 : i32
    return %c0_i32, %c0_i32_0 : i32, i32
  }
  func.func @transform_8(%arg0: i32) -> (i32, i32) {
    %c0_i32 = arith.constant 0 : i32
    %c0_i32_0 = arith.constant 0 : i32
    %c0_i32_1 = arith.constant 0 : i32
    return %c0_i32, %c0_i32_0 : i32, i32
  }
  func.func @transform_9(%arg0: i32) -> (i32, i32) {
    %c0_i32 = arith.constant 0 : i32
    %c0_i32_0 = arith.constant 0 : i32
    return %c0_i32, %arg0 : i32, i32
  }
}

</mosaic_0001>

<llo_original>
// kernel: tpu_custom_call.1
$region0: #{tpu_custom_call.1}
  #allocation0 [shape = 'u32[]', space=smem, size = 0x4, offset = 0x4, fixed_abs, tag = 'smem constant byte address 0x4 - core index']
  #allocation1 [shape = 'u32[144,128]{1,0:T(1,128)}', space=vmem, size = 0x12000, scoped, tag = 'internal scratch']
  #allocation2 [shape = 'f32[1,1]{1,0:T(1,128)S(6)}', space=smem, size = 0x200, scoped, tag = 'scoped memory for tpu_custom_call.1']
  %s0 = inlined_call_operand.vmem [shape: f32[2,8], index: 0, kind: input, shape index: {}]
  %s1 = inlined_call_operand.vmem [shape: f32[2,2], index: 1, kind: input, shape index: {}]
  %s2 = inlined_call_operand.vmem [shape: f32[32,8], index: 2, kind: input, shape index: {}]
  %s3 = inlined_call_operand.vmem [shape: f32[32,2], index: 3, kind: input, shape index: {}]
  %s4 = inlined_call_operand.vmem [shape: f32[32,1], index: 4, kind: input, shape index: {}]
  %s5 = inlined_call_operand.vmem [shape: f32[32,32], index: 5, kind: input, shape index: {}]
  %s6 = inlined_call_operand.vmem [shape: f32[32,1], index: 6, kind: input, shape index: {}]
  %s7 = inlined_call_operand.vmem [shape: f32[1,32], index: 7, kind: input, shape index: {}]
  %s8 = inlined_call_operand.<no memory space> [shape: f32[1,1], index: 8, kind: input, shape index: {}]
  %s9 = inlined_call_operand.hbm [shape: f32[1,2], index: 9, kind: output, shape index: {}]
  %s10 = sld [smem:[#allocation0]]
  $region46: #{tpu_custom_call.1} parent=0
    _
  %s12 = ssub.s32 1, %s10
  %s13 = scalar_select 0, %s12, %s10
  %14 = sst [smem:[#allocation2]] %s8
  $region1: #{tpu_custom_call.1} parent=0
    #allocation3 [shape = 'u8[512]{0}', space=vmem, size = 0x400, scoped, tag = 'output window, operand 0, single buffered']
    #allocation4 [shape = 's32[1]{0}', space=sflag, size = 0x4, scoped, tag = 'scoped memory for tpu_custom_call.1']
    %15 = vsyncpa [#allocation4], 0
    // Predicated region
    $region2: #{tpu_custom_call.1} parent=1 // pred_check
      _
    $region3: #{tpu_custom_call.1} parent=1 // pred_check_branch
      %17 = sbr.rel (0) target = $region5
    $region4: #{tpu_custom_call.1} parent=1 // pred_region
      _
    $region5: #{tpu_custom_call.1} parent=1 // pred_fallthru
      _
    // Predicated region
    $region6: #{tpu_custom_call.1} parent=1 // pred_check
      _
    $region7: #{tpu_custom_call.1} parent=1 // pred_check_branch
      %19 = sbr.rel (0) target = $region9
    $region8: #{tpu_custom_call.1} parent=1 // pred_region
      _
    $region9: #{tpu_custom_call.1} parent=1 // pred_fallthru
      _
    // Predicated region
    $region10: #{tpu_custom_call.1} parent=1 // pred_check
      _
    $region11: #{tpu_custom_call.1} parent=1 // pred_check_branch
      %21 = sbr.rel (0) target = $region13
    $region12: #{tpu_custom_call.1} parent=1 // pred_region
      _
    $region13: #{tpu_custom_call.1} parent=1 // pred_fallthru
      _
    // Predicated region
    $region14: #{tpu_custom_call.1} parent=1 // pred_check
      _
    $region15: #{tpu_custom_call.1} parent=1 // pred_check_branch
      %23 = sbr.rel (0) target = $region17
    $region16: #{tpu_custom_call.1} parent=1 // pred_region
      _
    $region17: #{tpu_custom_call.1} parent=1 // pred_fallthru
      _
    // Predicated region
    $region18: #{tpu_custom_call.1} parent=1 // pred_check
      _
    $region19: #{tpu_custom_call.1} parent=1 // pred_check_branch
      %25 = sbr.rel (0) target = $region21
    $region20: #{tpu_custom_call.1} parent=1 // pred_region
      _
    $region21: #{tpu_custom_call.1} parent=1 // pred_fallthru
      _
    // Predicated region
    $region22: #{tpu_custom_call.1} parent=1 // pred_check
      _
    $region23: #{tpu_custom_call.1} parent=1 // pred_check_branch
      %27 = sbr.rel (0) target = $region25
    $region24: #{tpu_custom_call.1} parent=1 // pred_region
      _
    $region25: #{tpu_custom_call.1} parent=1 // pred_fallthru
      _
    // Predicated region
    $region26: #{tpu_custom_call.1} parent=1 // pred_check
      _
    $region27: #{tpu_custom_call.1} parent=1 // pred_check_branch
      %29 = sbr.rel (0) target = $region29
    $region28: #{tpu_custom_call.1} parent=1 // pred_region
      _
    $region29: #{tpu_custom_call.1} parent=1 // pred_fallthru
      _
    // Predicated region
    $region30: #{tpu_custom_call.1} parent=1 // pred_check
      _
    $region31: #{tpu_custom_call.1} parent=1 // pred_check_branch
      %31 = sbr.rel (0) target = $region33
    $region32: #{tpu_custom_call.1} parent=1 // pred_region
      _
    $region33: #{tpu_custom_call.1} parent=1 // pred_fallthru
      _
    // Predicated region
    $region34: #{tpu_custom_call.1} parent=1 // pred_check
      _
    $region35: #{tpu_custom_call.1} parent=1 // pred_check_branch
      %33 = sbr.rel (0) target = $region37
    $region36: #{tpu_custom_call.1} parent=1 // pred_region
      _
    $region37: #{tpu_custom_call.1} parent=1 // pred_fallthru
      _
    %v34 = vld [vmem:[%s0] sm:$0x3]
    %v35 = vld [vmem:[%s1] sm:$0x3]
    %v36 = vld [vmem:[%s2] sm:$0xff]
    %v37 = vld [vmem:[%s2 + $0x8] sm:$0xff]
    %v38 = vld [vmem:[%s2 + $0x10] sm:$0xff]
    %v39 = vld [vmem:[%s2 + $0x18] sm:$0xff]
    %v40 = vld [vmem:[%s3] sm:$0xff]
    %v41 = vld [vmem:[%s3 + $0x8] sm:$0xff]
    %v42 = vld [vmem:[%s3 + $0x10] sm:$0xff]
    %v43 = vld [vmem:[%s3 + $0x18] sm:$0xff]
    %vm44 = vcmask 15360
    %v46 = vsel %vm44, %v40, 0
    %v49 = vsel %vm44, %v41, 0
    %v52 = vsel %vm44, %v42, 0
    %v55 = vsel %vm44, %v43, 0
    %v58 = vsel %vm44, %v35, 0
    %60 = vmatprep.subr.mxu0 0.0
    %61 = vmatpush1.xpose.msra.mxu0 %v58
    %62 = vmatprep.subr.mxu0 0.0
    %63 = vmatpush1.xpose.msra.mxu0 0.0
    %64 = vmatprep.subr.mxu0 0.0
    %65 = vmatpush1.xpose.msra.mxu0 0.0
    %66 = vmatprep.subr.mxu0 0.0
    %67 = vmatpush1.xpose.msra.mxu0 0.0
    %68 = vmatprep.subr.mxu0 0.0
    %69 = vmatpush1.xpose.msra.mxu0 0.0
    %70 = vmatprep.subr.mxu0 0.0
    %71 = vmatpush1.xpose.msra.mxu0 0.0
    %72 = vmatprep.subr.mxu0 0.0
    %73 = vmatpush1.xpose.msra.mxu0 0.0
    %74 = vmatprep.subr.mxu0 0.0
    %75 = vmatpush1.xpose.msra.mxu0 0.0
    %76 = vmatprep.subr.mxu0 0.0
    %77 = vmatpush1.xpose.msra.mxu0 0.0
    %78 = vmatprep.subr.mxu0 0.0
    %79 = vmatpush1.xpose.msra.mxu0 0.0
    %80 = vmatprep.subr.mxu0 0.0
    %81 = vmatpush1.xpose.msra.mxu0 0.0
    %82 = vmatprep.subr.mxu0 0.0
    %83 = vmatpush1.xpose.msra.mxu0 0.0
    %84 = vmatprep.subr.mxu0 0.0
    %85 = vmatpush1.xpose.msra.mxu0 0.0
    %86 = vmatprep.subr.mxu0 0.0
    %87 = vmatpush1.xpose.msra.mxu0 0.0
    %88 = vmatprep.subr.mxu0 0.0
    %89 = vmatpush1.xpose.msra.mxu0 0.0
    %90 = vmatprep.subr.mxu0 0.0
    %91 = vmatpush1.xpose.msra.mxu0 0.0
    %92 = vmatprep.subr.mxu0 0.0
    %93 = vmatpush1.xpose.msra.mxu0 0.0
    %94 = vmatprep.subr.mxu0 0.0
    %95 = vmatpush1.xpose.msra.mxu0 0.0
    %96 = vmatprep.subr.mxu0 0.0
    %97 = vmatpush1.xpose.msra.mxu0 0.0
    %98 = vmatprep.subr.mxu0 0.0
    %99 = vmatpush1.xpose.msra.mxu0 0.0
    %100 = vmatprep.subr.mxu0 0.0
    %101 = vmatpush1.xpose.msra.mxu0 0.0
    %102 = vmatprep.subr.mxu0 0.0
    %103 = vmatpush1.xpose.msra.mxu0 0.0
    %104 = vmatprep.subr.mxu0 0.0
    %105 = vmatpush1.xpose.msra.mxu0 0.0
    %106 = vmatprep.subr.mxu0 0.0
    %107 = vmatpush1.xpose.msra.mxu0 0.0
    %108 = vmatprep.subr.mxu0 0.0
    %109 = vmatpush1.xpose.msra.mxu0 0.0
    %110 = vmatprep.subr.mxu0 0.0
    %111 = vmatpush1.xpose.msra.mxu0 0.0
    %112 = vmatprep.subr.mxu0 0.0
    %113 = vmatpush1.xpose.msra.mxu0 0.0
    %114 = vmatprep.subr.mxu0 0.0
    %115 = vmatpush1.xpose.msra.mxu0 0.0
    %116 = vmatprep.subr.mxu0 0.0
    %117 = vmatpush1.xpose.msra.mxu0 0.0
    %118 = vmatprep.subr.mxu0 0.0
    %119 = vmatpush1.xpose.msra.mxu0 0.0
    %120 = vmatprep.subr.mxu0 0.0
    %121 = vmatpush1.xpose.msra.mxu0 0.0
    %122 = vmatprep.subr.mxu0 0.0
    %123 = vmatpush1.xpose.msra.mxu0 0.0
    %124 = vmatprep.mubr.f32.mxu0 0.0
    %125 = vmatmul.mubr.f32.gmra.mrb[0].mxu0 %v46
    %v126 = vpop.f32.mrb[0].mxu0
    %v127 = vadd.f32 0.0, %v126
    %v128 = vpop.f32.mrb[0].mxu0
    %129 = vmatprep.mubr.f32.mxu0 0.0
    %130 = vmatmul.mubr.f32.gmra.mrb[0].mxu0 %v49
    %v131 = vpop.f32.mrb[0].mxu0
    %v132 = vadd.f32 0.0, %v131
    %v133 = vpop.f32.mrb[0].mxu0
    %134 = vmatprep.mubr.f32.mxu0 0.0
    %135 = vmatmul.mubr.f32.gmra.mrb[0].mxu0 %v52
    %v136 = vpop.f32.mrb[0].mxu0
    %v137 = vadd.f32 0.0, %v136
    %v138 = vpop.f32.mrb[0].mxu0
    %139 = vmatprep.mubr.f32.mxu0 0.0
    %140 = vmatmul.mubr.f32.gmra.mrb[0].mxu0 %v55
    %v141 = vpop.f32.mrb[0].mxu0
    %v142 = vadd.f32 0.0, %v141
    %v143 = vpop.f32.mrb[0].mxu0
    %144 = vdwg.mxu0
    %vm145 = vcmask 64512
    %v147 = vsel %vm145, %v36, 0
    %v150 = vsel %vm145, %v37, 0
    %v153 = vsel %vm145, %v38, 0
    %v156 = vsel %vm145, %v39, 0
    %v159 = vsel %vm145, %v34, 0
    %161 = vmatprep.subr.mxu0 0.0
    %162 = vmatpush1.xpose.msra.mxu0 %v159
    %163 = vmatprep.subr.mxu0 0.0
    %164 = vmatpush1.xpose.msra.mxu0 0.0
    %165 = vmatprep.subr.mxu0 0.0
    %166 = vmatpush1.xpose.msra.mxu0 0.0
    %167 = vmatprep.subr.mxu0 0.0
    %168 = vmatpush1.xpose.msra.mxu0 0.0
    %169 = vmatprep.subr.mxu0 0.0
    %170 = vmatpush1.xpose.msra.mxu0 0.0
    %171 = vmatprep.subr.mxu0 0.0
    %172 = vmatpush1.xpose.msra.mxu0 0.0
    %173 = vmatprep.subr.mxu0 0.0
    %174 = vmatpush1.xpose.msra.mxu0 0.0
    %175 = vmatprep.subr.mxu0 0.0
    %176 = vmatpush1.xpose.msra.mxu0 0.0
    %177 = vmatprep.subr.mxu0 0.0
    %178 = vmatpush1.xpose.msra.mxu0 0.0
    %179 = vmatprep.subr.mxu0 0.0
    %180 = vmatpush1.xpose.msra.mxu0 0.0
    %181 = vmatprep.subr.mxu0 0.0
    %182 = vmatpush1.xpose.msra.mxu0 0.0
    %183 = vmatprep.subr.mxu0 0.0
    %184 = vmatpush1.xpose.msra.mxu0 0.0
    %185 = vmatprep.subr.mxu0 0.0
    %186 = vmatpush1.xpose.msra.mxu0 0.0
    %187 = vmatprep.subr.mxu0 0.0
    %188 = vmatpush1.xpose.msra.mxu0 0.0
    %189 = vmatprep.subr.mxu0 0.0
    %190 = vmatpush1.xpose.msra.mxu0 0.0
    %191 = vmatprep.subr.mxu0 0.0
    %192 = vmatpush1.xpose.msra.mxu0 0.0
    %193 = vmatprep.subr.mxu0 0.0
    %194 = vmatpush1.xpose.msra.mxu0 0.0
    %195 = vmatprep.subr.mxu0 0.0
    %196 = vmatpush1.xpose.msra.mxu0 0.0
    %197 = vmatprep.subr.mxu0 0.0
    %198 = vmatpush1.xpose.msra.mxu0 0.0
    %199 = vmatprep.subr.mxu0 0.0
    %200 = vmatpush1.xpose.msra.mxu0 0.0
    %201 = vmatprep.subr.mxu0 0.0
    %202 = vmatpush1.xpose.msra.mxu0 0.0
    %203 = vmatprep.subr.mxu0 0.0
    %204 = vmatpush1.xpose.msra.mxu0 0.0
    %205 = vmatprep.subr.mxu0 0.0
    %206 = vmatpush1.xpose.msra.mxu0 0.0
    %207 = vmatprep.subr.mxu0 0.0
    %208 = vmatpush1.xpose.msra.mxu0 0.0
    %209 = vmatprep.subr.mxu0 0.0
    %210 = vmatpush1.xpose.msra.mxu0 0.0
    %211 = vmatprep.subr.mxu0 0.0
    %212 = vmatpush1.xpose.msra.mxu0 0.0
    %213 = vmatprep.subr.mxu0 0.0
    %214 = vmatpush1.xpose.msra.mxu0 0.0
    %215 = vmatprep.subr.mxu0 0.0
    %216 = vmatpush1.xpose.msra.mxu0 0.0
    %217 = vmatprep.subr.mxu0 0.0
    %218 = vmatpush1.xpose.msra.mxu0 0.0
    %219 = vmatprep.subr.mxu0 0.0
    %220 = vmatpush1.xpose.msra.mxu0 0.0
    %221 = vmatprep.subr.mxu0 0.0
    %222 = vmatpush1.xpose.msra.mxu0 0.0
    %223 = vmatprep.subr.mxu0 0.0
    %224 = vmatpush1.xpose.msra.mxu0 0.0
    %225 = vmatprep.mubr.f32.mxu0 0.0
    %226 = vmatmul.mubr.f32.gmra.mrb[0].mxu0 %v147
    %v227 = vpop.f32.mrb[0].mxu0
    %v228 = vadd.f32 %v127, %v227
    %v229 = vpop.f32.mrb[0].mxu0
    %230 = vmatprep.mubr.f32.mxu0 0.0
    %231 = vmatmul.mubr.f32.gmra.mrb[0].mxu0 %v150
    %v232 = vpop.f32.mrb[0].mxu0
    %v233 = vadd.f32 %v132, %v232
    %v234 = vpop.f32.mrb[0].mxu0
    %235 = vmatprep.mubr.f32.mxu0 0.0
    %236 = vmatmul.mubr.f32.gmra.mrb[0].mxu0 %v153
    %v237 = vpop.f32.mrb[0].mxu0
    %v238 = vadd.f32 %v137, %v237
    %v239 = vpop.f32.mrb[0].mxu0
    %240 = vmatprep.mubr.f32.mxu0 0.0
    %241 = vmatmul.mubr.f32.gmra.mrb[0].mxu0 %v156
    %v242 = vpop.f32.mrb[0].mxu0
    %v243 = vadd.f32 %v142, %v242
    %v244 = vpop.f32.mrb[0].mxu0
    %245 = vdwg.mxu0
    %v246 = vld [vmem:[%s4] sm:$0xff]
    %v247 = vld [vmem:[%s4 + $0x8] sm:$0xff]
    %v248 = vld [vmem:[%s4 + $0x10] sm:$0xff]
    %v249 = vld [vmem:[%s4 + $0x18] sm:$0xff]
    %251 = vset.pattern.permute.xlu0 0
    %252 = vperm.xlu0 %251, %v246
    %v253 = vpop.permute.xlu0 %252
    %256 = vset.pattern.permute.xlu0 0
    %257 = vperm.xlu0 %256, %v247
    %v258 = vpop.permute.xlu0 %257
    %261 = vset.pattern.permute.xlu0 0
    %262 = vperm.xlu0 %261, %v248
    %v263 = vpop.permute.xlu0 %262
    %266 = vset.pattern.permute.xlu0 0
    %267 = vperm.xlu0 %266, %v249
    %v268 = vpop.permute.xlu0 %267
    %v270 = vadd.f32 %v228, %v253
    %v271 = vadd.f32 %v233, %v258
    %v272 = vadd.f32 %v238, %v263
    %v273 = vadd.f32 %v243, %v268
    %v274 = vmax.f32 %v270, 0.0
    %v275 = vmax.f32 %v271, 0.0
    %v276 = vmax.f32 %v272, 0.0
    %v277 = vmax.f32 %v273, 0.0
    %v278 = vld [vmem:[%s5] sm:$0xff]
    %v279 = vld [vmem:[%s5 + $0x8] sm:$0xff]
    %v280 = vld [vmem:[%s5 + $0x10] sm:$0xff]
    %v281 = vld [vmem:[%s5 + $0x18] sm:$0xff]
    %v282 = vld [vmem:[%s6] sm:$0xff]
    %v283 = vld [vmem:[%s6 + $0x8] sm:$0xff]
    %v284 = vld [vmem:[%s6 + $0x10] sm:$0xff]
    %v285 = vld [vmem:[%s6 + $0x18] sm:$0xff]
    %287 = vset.pattern.permute.xlu0 0
    %288 = vperm.xlu0 %287, %v282
    %v289 = vpop.permute.xlu0 %288
    %292 = vset.pattern.permute.xlu0 0
    %293 = vperm.xlu0 %292, %v283
    %v294 = vpop.permute.xlu0 %293
    %297 = vset.pattern.permute.xlu0 0
    %298 = vperm.xlu0 %297, %v284
    %v299 = vpop.permute.xlu0 %298
    %302 = vset.pattern.permute.xlu0 0
    %303 = vperm.xlu0 %302, %v285
    %v304 = vpop.permute.xlu0 %303
    %vm306 = vcmask 261120
    %v308 = vsel %vm306, %v278, 0
    %v311 = vsel %vm306, %v279, 0
    %v314 = vsel %vm306, %v280, 0
    %v317 = vsel %vm306, %v281, 0
    %319 = vmatprep.subr.mxu0 0.0
    %320 = vmatpush1.msra.mxu0 %v274
    %321 = vmatprep.subr.mxu0 0.0
    %322 = vmatpush1.msra.mxu0 %v275
    %323 = vmatprep.subr.mxu0 0.0
    %324 = vmatpush1.msra.mxu0 %v276
    %325 = vmatprep.subr.mxu0 0.0
    %326 = vmatpush1.msra.mxu0 %v277
    %327 = vmatprep.subr.mxu0 0.0
    %328 = vmatpush1.msra.mxu0 0.0
    %329 = vmatprep.subr.mxu0 0.0
    %330 = vmatpush1.msra.mxu0 0.0
    %331 = vmatprep.subr.mxu0 0.0
    %332 = vmatpush1.msra.mxu0 0.0
    %333 = vmatprep.subr.mxu0 0.0
    %334 = vmatpush1.msra.mxu0 0.0
    %335 = vmatprep.subr.mxu0 0.0
    %336 = vmatpush1.msra.mxu0 0.0
    %337 = vmatprep.subr.mxu0 0.0
    %338 = vmatpush1.msra.mxu0 0.0
    %339 = vmatprep.subr.mxu0 0.0
    %340 = vmatpush1.msra.mxu0 0.0
    %341 = vmatprep.subr.mxu0 0.0
    %342 = vmatpush1.msra.mxu0 0.0
    %343 = vmatprep.subr.mxu0 0.0
    %344 = vmatpush1.msra.mxu0 0.0
    %345 = vmatprep.subr.mxu0 0.0
    %346 = vmatpush1.msra.mxu0 0.0
    %347 = vmatprep.subr.mxu0 0.0
    %348 = vmatpush1.msra.mxu0 0.0
    %349 = vmatprep.subr.mxu0 0.0
    %350 = vmatpush1.msra.mxu0 0.0
    %351 = vmatprep.subr.mxu0 0.0
    %352 = vmatpush1.msra.mxu0 0.0
    %353 = vmatprep.subr.mxu0 0.0
    %354 = vmatpush1.msra.mxu0 0.0
    %355 = vmatprep.subr.mxu0 0.0
    %356 = vmatpush1.msra.mxu0 0.0
    %357 = vmatprep.subr.mxu0 0.0
    %358 = vmatpush1.msra.mxu0 0.0
    %359 = vmatprep.subr.mxu0 0.0
    %360 = vmatpush1.msra.mxu0 0.0
    %361 = vmatprep.subr.mxu0 0.0
    %362 = vmatpush1.msra.mxu0 0.0
    %363 = vmatprep.subr.mxu0 0.0
    %364 = vmatpush1.msra.mxu0 0.0
    %365 = vmatprep.subr.mxu0 0.0
    %366 = vmatpush1.msra.mxu0 0.0
    %367 = vmatprep.subr.mxu0 0.0
    %368 = vmatpush1.msra.mxu0 0.0
    %369 = vmatprep.subr.mxu0 0.0
    %370 = vmatpush1.msra.mxu0 0.0
    %371 = vmatprep.subr.mxu0 0.0
    %372 = vmatpush1.msra.mxu0 0.0
    %373 = vmatprep.subr.mxu0 0.0
    %374 = vmatpush1.msra.mxu0 0.0
    %375 = vmatprep.subr.mxu0 0.0
    %376 = vmatpush1.msra.mxu0 0.0
    %377 = vmatprep.subr.mxu0 0.0
    %378 = vmatpush1.msra.mxu0 0.0
    %379 = vmatprep.subr.mxu0 0.0
    %380 = vmatpush1.msra.mxu0 0.0
    %381 = vmatprep.subr.mxu0 0.0
    %382 = vmatpush1.msra.mxu0 0.0
    %383 = vmatprep.mubr.f32.mxu0 0.0
    %384 = vmatmul.mubr.f32.gmra.mrb[0].mxu0 %v308
    %v385 = vpop.f32.mrb[0].mxu0
    %v386 = vadd.f32 %v289, %v385
    %v387 = vpop.f32.mrb[0].mxu0
    %388 = vmatprep.mubr.f32.mxu0 0.0
    %389 = vmatmul.mubr.f32.gmra.mrb[0].mxu0 %v311
    %v390 = vpop.f32.mrb[0].mxu0
    %v391 = vadd.f32 %v294, %v390
    %v392 = vpop.f32.mrb[0].mxu0
    %393 = vmatprep.mubr.f32.mxu0 0.0
    %394 = vmatmul.mubr.f32.gmra.mrb[0].mxu0 %v314
    %v395 = vpop.f32.mrb[0].mxu0
    %v396 = vadd.f32 %v299, %v395
    %v397 = vpop.f32.mrb[0].mxu0
    %398 = vmatprep.mubr.f32.mxu0 0.0
    %399 = vmatmul.mubr.f32.gmra.mrb[0].mxu0 %v317
    %v400 = vpop.f32.mrb[0].mxu0
    %v401 = vadd.f32 %v304, %v400
    %v402 = vpop.f32.mrb[0].mxu0
    %403 = vdwg.mxu0
    %v404 = vmax.f32 %v386, 0.0
    %v405 = vmax.f32 %v391, 0.0
    %v406 = vmax.f32 %v396, 0.0
    %v407 = vmax.f32 %v401, 0.0
    %v408 = vld [vmem:[%s7] sm:$0x1]
    %s409 = sld [smem:[#allocation2]]
    %v410 = vstv %s409
    %v412 = vsel %vm306, %v408, 0
    %414 = vmatprep.subr.mxu0 0.0
    %415 = vmatpush1.msra.mxu0 %v404
    %416 = vmatprep.subr.mxu0 0.0
    %417 = vmatpush1.msra.mxu0 %v405
    %418 = vmatprep.subr.mxu0 0.0
    %419 = vmatpush1.msra.mxu0 %v406
    %420 = vmatprep.subr.mxu0 0.0
    %421 = vmatpush1.msra.mxu0 %v407
    %422 = vmatprep.subr.mxu0 0.0
    %423 = vmatpush1.msra.mxu0 0.0
    %424 = vmatprep.subr.mxu0 0.0
    %425 = vmatpush1.msra.mxu0 0.0
    %426 = vmatprep.subr.mxu0 0.0
    %427 = vmatpush1.msra.mxu0 0.0
    %428 = vmatprep.subr.mxu0 0.0
    %429 = vmatpush1.msra.mxu0 0.0
    %430 = vmatprep.subr.mxu0 0.0
    %431 = vmatpush1.msra.mxu0 0.0
    %432 = vmatprep.subr.mxu0 0.0
    %433 = vmatpush1.msra.mxu0 0.0
    %434 = vmatprep.subr.mxu0 0.0
    %435 = vmatpush1.msra.mxu0 0.0
    %436 = vmatprep.subr.mxu0 0.0
    %437 = vmatpush1.msra.mxu0 0.0
    %438 = vmatprep.subr.mxu0 0.0
    %439 = vmatpush1.msra.mxu0 0.0
    %440 = vmatprep.subr.mxu0 0.0
    %441 = vmatpush1.msra.mxu0 0.0
    %442 = vmatprep.subr.mxu0 0.0
    %443 = vmatpush1.msra.mxu0 0.0
    %444 = vmatprep.subr.mxu0 0.0
    %445 = vmatpush1.msra.mxu0 0.0
    %446 = vmatprep.subr.mxu0 0.0
    %447 = vmatpush1.msra.mxu0 0.0
    %448 = vmatprep.subr.mxu0 0.0
    %449 = vmatpush1.msra.mxu0 0.0
    %450 = vmatprep.subr.mxu0 0.0
    %451 = vmatpush1.msra.mxu0 0.0
    %452 = vmatprep.subr.mxu0 0.0
    %453 = vmatpush1.msra.mxu0 0.0
    %454 = vmatprep.subr.mxu0 0.0
    %455 = vmatpush1.msra.mxu0 0.0
    %456 = vmatprep.subr.mxu0 0.0
    %457 = vmatpush1.msra.mxu0 0.0
    %458 = vmatprep.subr.mxu0 0.0
    %459 = vmatpush1.msra.mxu0 0.0
    %460 = vmatprep.subr.mxu0 0.0
    %461 = vmatpush1.msra.mxu0 0.0
    %462 = vmatprep.subr.mxu0 0.0
    %463 = vmatpush1.msra.mxu0 0.0
    %464 = vmatprep.subr.mxu0 0.0
    %465 = vmatpush1.msra.mxu0 0.0
    %466 = vmatprep.subr.mxu0 0.0
    %467 = vmatpush1.msra.mxu0 0.0
    %468 = vmatprep.subr.mxu0 0.0
    %469 = vmatpush1.msra.mxu0 0.0
    %470 = vmatprep.subr.mxu0 0.0
    %471 = vmatpush1.msra.mxu0 0.0
    %472 = vmatprep.subr.mxu0 0.0
    %473 = vmatpush1.msra.mxu0 0.0
    %474 = vmatprep.subr.mxu0 0.0
    %475 = vmatpush1.msra.mxu0 0.0
    %476 = vmatprep.subr.mxu0 0.0
    %477 = vmatpush1.msra.mxu0 0.0
    %478 = vmatprep.mubr.f32.mxu0 0.0
    %479 = vmatmul.mubr.f32.gmra.mrb[0].mxu0 %v412
    %v480 = vpop.f32.mrb[0].mxu0
    %v481 = vadd.f32 %v410, %v480
    %v482 = vpop.f32.mrb[0].mxu0
    %483 = vdwg.mxu0
    %vm484 = vcmask 8192
    %485 = vst.msk [vmem:[#allocation3] sm:$0x1] %vm484, %v481
    // Predicated region
    $region38: #{tpu_custom_call.1} parent=1 // pred_check
      _
    $region39: #{tpu_custom_call.1} parent=1 // pred_check_branch
      %487 = sbr.rel (0) target = $region41
    $region40: #{tpu_custom_call.1} parent=1 // pred_region
      %s489 = ssub.s32 16, 16
      %490 = vsyncadd [#allocation4], %s489
      %s492 = sshll.u32 [#allocation3], 4
      %s493 = int_to_ptr.vmem [resolvable:$true] %s492
      %495 = dma.vmem_to_hbm [thread:$0]  %s493, 16, %s9, [#allocation4]
    $region41: #{tpu_custom_call.1} parent=1 // pred_fallthru
      _
    // Predicated region
    $region42: #{tpu_custom_call.1} parent=1 // pred_check
      _
    $region43: #{tpu_custom_call.1} parent=1 // pred_check_branch
      %497 = sbr.rel (0) target = $region45
    $region44: #{tpu_custom_call.1} parent=1 // pred_region
      %498 = dma.done [#allocation4], 16
    $region45: #{tpu_custom_call.1} parent=1 // pred_fallthru
      _
    %499 = vsyncpa [#allocation4], 1

</llo_original>
